<compile_context>
chip_gen: v6e
topology: v6e:2x2x1
jax: 0.10.0
libtpu: 0.0.40
codegen_flags: <defaults>
</compile_context>

<pallas_src>
import functools

import jax
import jax.numpy as jnp
from jax import lax
from jax.experimental import pallas as pl
from jax.experimental.pallas import tpu as pltpu

LN_EPS = 1e-5            # torch.nn.LayerNorm default
LANE = 128               # TPU lane width
DEFAULT_TILE_B = 256     # batch rows per grid step (v7x-safe; v6e can use 512)


def _round_up(n, m):
    return -(-n // m) * m


# ---------------------------------------------------------------------------
# Fused kernel (built per static network structure)
# ---------------------------------------------------------------------------
def _make_policy_head_kernel(num_layers, padded, sigmoid_ranges, tanh_ranges):
    """Refs: (x, w_0..w_{L-1}, head_w, aux, out).

    aux rows: [b_0, gamma_0, beta_0, ..., b_{L-1}, gamma_{L-1}, beta_{L-1}, head_b],
    each zero-padded to `padded` lanes.
    """

    def kernel(*refs):
        x_ref = refs[0]
        o_ref = refs[-1]
        aux_ref = refs[-2]
        head_w_ref = refs[-3]

        h = x_ref[...]                                          # bf16 [tb, Din]
        for i in range(num_layers):                             # static unroll
            w_ref = refs[1 + i]                                 # bf16 [Dprev, D]
            z = jnp.dot(h, w_ref[...],                          # MXU, f32 acc
                        preferred_element_type=jnp.float32)
            d = z.shape[-1]
            b     = aux_ref[3 * i + 0: 3 * i + 1, :d]
            gamma = aux_ref[3 * i + 1: 3 * i + 2, :d]
            beta  = aux_ref[3 * i + 2: 3 * i + 3, :d]
            z = z + b
            # Two-pass (torch-style) LayerNorm statistics, all f32.
            mean = jnp.mean(z, axis=-1, keepdims=True)
            centered = z - mean
            var = jnp.mean(centered * centered, axis=-1, keepdims=True)
            y = centered * lax.rsqrt(var + LN_EPS) * gamma + beta
            h = jnp.maximum(y, 0.0).astype(jnp.bfloat16)        # ReLU -> bf16 MXU feed
            # Dropout between hidden layers: identity in eval mode.

        head_b = aux_ref[3 * num_layers: 3 * num_layers + 1, :padded]
        z = jnp.dot(h, head_w_ref[...],
                    preferred_element_type=jnp.float32) + head_b  # [tb, padded] f32

        out = z
        if sigmoid_ranges or tanh_ranges:
            col = lax.broadcasted_iota(jnp.int32, z.shape, 1)   # lane index
            if sigmoid_ranges:
                m = functools.reduce(
                    jnp.logical_or,
                    [(col >= s) & (col < e) for s, e in sigmoid_ranges])
                out = jnp.where(m, jax.nn.sigmoid(z), out)      # EUP
            if tanh_ranges:
                m = functools.reduce(
                    jnp.logical_or,
                    [(col >= s) & (col < e) for s, e in tanh_ranges])
                out = jnp.where(m, jnp.tanh(z), out)            # EUP
        # 'softmax' activation in the PyTorch module is a pass -> raw logits.

        o_ref[...] = out.astype(o_ref.dtype)                    # lane-dense bf16 store

    return kernel


def _vmem_limit_bytes(tile_b, input_dim, layer_dims, padded):
    """Generation-aware scoped-VMEM budget (floor 16 MiB, cap 48 MiB for v7x)."""
    bf2, f4 = 2, 4
    x_tile = tile_b * input_dim * bf2
    o_tile = tile_b * padded * bf2
    w_bytes, prev = 0, input_dim
    for d in layer_dims:
        w_bytes += prev * d * bf2
        prev = d
    w_bytes += prev * padded * bf2
    aux_bytes = (3 * len(layer_dims) + 1) * padded * f4
    max_d = max([input_dim, padded] + list(layer_dims))
    intermediates = 8 * tile_b * max_d * f4
    need = 2 * (x_tile + o_tile) + 2 * (w_bytes + aux_bytes) + intermediates
    return int(min(max(2 * need, 16 * 1024 * 1024), 48 * 1024 * 1024))


# ---------------------------------------------------------------------------
# Parameter construction (torch.nn.Linear-style init) + kernel-ready packing
# ---------------------------------------------------------------------------
def init_policy_head_params(key, input_dim, hidden_dims, output_heads):
    layers = []
    prev = input_dim
    for hdim in hidden_dims:
        key, kw, kb = jax.random.split(key, 3)
        bound = 1.0 / float(prev) ** 0.5
        w = jax.random.uniform(kw, (prev, hdim), jnp.float32, -bound, bound)
        b = jax.random.uniform(kb, (hdim,), jnp.float32, -bound, bound)
        layers.append(dict(
            w=w.astype(jnp.bfloat16),          # MXU operand (half DMA, stays resident)
            w_f32=w,                           # pure-JAX reference
            b=b,
            gamma=jnp.ones((hdim,), jnp.float32),
            beta=jnp.zeros((hdim,), jnp.float32),
        ))
        prev = hdim
    final_hidden = hidden_dims[-1] if hidden_dims else input_dim

    # Concatenate all head linears into one lane-dense matmul.
    heads_meta, ws, bs = [], [], []
    off = 0
    for name, cfg in output_heads.items():
        key, kw, kb = jax.random.split(key, 3)
        bound = 1.0 / float(final_hidden) ** 0.5
        d = cfg["dim"]
        ws.append(jax.random.uniform(kw, (final_hidden, d), jnp.float32, -bound, bound))
        bs.append(jax.random.uniform(kb, (d,), jnp.float32, -bound, bound))
        heads_meta.append(dict(name=name, start=off, end=off + d,
                               activation=cfg.get("activation", None)))
        off += d
    total = off
    padded = max(LANE, _round_up(total, LANE))              # 128-lane output slab

    w_cat = jnp.concatenate(ws, axis=1)
    b_cat = jnp.concatenate(bs, axis=0)
    head_w = jnp.zeros((final_hidden, padded), jnp.float32).at[:, :total].set(w_cat)
    head_b = jnp.zeros((padded,), jnp.float32).at[:total].set(b_cat)

    # Pack every layer's (b, gamma, beta) plus head_b into ONE [3L+1, padded] ref.
    aux_width = max([padded] + list(hidden_dims))
    aux_rows = []
    for layer in layers:
        for vec in (layer["b"], layer["gamma"], layer["beta"]):
            aux_rows.append(jnp.zeros((aux_width,), jnp.float32).at[:vec.shape[0]].set(vec))
    aux_rows.append(jnp.zeros((aux_width,), jnp.float32).at[:padded].set(head_b))
    aux = jnp.stack(aux_rows, axis=0)                        # [3L+1, aux_width]

    return dict(
        layers=layers,
        aux=aux,
        head_w=head_w.astype(jnp.bfloat16),
        head_w_f32=head_w,
        head_b=head_b,
        heads_meta=heads_meta,
        padded=padded,
        hidden_dims=tuple(hidden_dims),
        input_dim=input_dim,
    )


# ---------------------------------------------------------------------------
# Forward: one fused, batch-tiled pallas_call for the whole PolicyHead
# ---------------------------------------------------------------------------
def policy_head_forward(params, x, tile_b=DEFAULT_TILE_B):
    B, Din = x.shape
    padded = params["padded"]
    hidden_dims = params["hidden_dims"]
    num_layers = len(hidden_dims)

    sigmoid_ranges = tuple((m["start"], m["end"]) for m in params["heads_meta"]
                           if m["activation"] == "sigmoid")
    tanh_ranges = tuple((m["start"], m["end"]) for m in params["heads_meta"]
                        if m["activation"] == "tanh")

    # Batch tile: multiple of 16 rows (packed bf16 sublanes on the MXU feed).
    tile_b = min(tile_b, _round_up(max(B, 1), 16))
    B_pad = _round_up(B, tile_b)
    x_p = jnp.zeros((B_pad, Din), jnp.bfloat16).at[:B].set(x.astype(jnp.bfloat16))

    kernel = _make_policy_head_kernel(num_layers, padded, sigmoid_ranges, tanh_ranges)

    const = lambda shape: pl.BlockSpec(shape, lambda i: (0,) * len(shape))  # resident

    inputs = [x_p]
    in_specs = [pl.BlockSpec((tile_b, Din), lambda i: (i, 0))]              # streamed
    for layer in params["layers"]:
        inputs.append(layer["w"])
        in_specs.append(const(layer["w"].shape))
    inputs.append(params["head_w"])
    in_specs.append(const(params["head_w"].shape))
    inputs.append(params["aux"])
    in_specs.append(const(params["aux"].shape))

    grid = (B_pad // tile_b,)
    slab = pl.pallas_call(
        kernel,
        grid=grid,
        out_shape=jax.ShapeDtypeStruct((B_pad, padded), jnp.bfloat16),      # 2x less writeback
        in_specs=in_specs,
        out_specs=pl.BlockSpec((tile_b, padded), lambda i: (i, 0)),
        compiler_params=pltpu.CompilerParams(
            dimension_semantics=("parallel",),                              # v7x 2-TC sharding
            vmem_limit_bytes=_vmem_limit_bytes(tile_b, Din, hidden_dims, padded)),
    )(*inputs)

    # Drop row padding, back to f32, slice the slab into per-head outputs.
    slab = slab[:B].astype(jnp.float32)
    return {m["name"]: slab[:, m["start"]:m["end"]] for m in params["heads_meta"]}


# ---------------------------------------------------------------------------
# Pure-JAX reference (f32 everywhere) for a sanity check
# ---------------------------------------------------------------------------
def policy_head_reference(params, x):
    h = x
    for layer in params["layers"]:
        z = h @ layer["w_f32"] + layer["b"]
        mean = jnp.mean(z, axis=-1, keepdims=True)
        var = jnp.mean((z - mean) ** 2, axis=-1, keepdims=True)
        z = (z - mean) / jnp.sqrt(var + LN_EPS)
        z = z * layer["gamma"] + layer["beta"]
        h = jnp.maximum(z, 0.0)
    slab = h @ params["head_w_f32"] + params["head_b"]
    outs = {}
    for m in params["heads_meta"]:
        o = slab[:, m["start"]:m["end"]]
        if m["activation"] == "sigmoid":
            o = jax.nn.sigmoid(o)
        elif m["activation"] == "tanh":
            o = jnp.tanh(o)
        outs[m["name"]] = o
    return outs


# ---------------------------------------------------------------------------
# Main
# ---------------------------------------------------------------------------
if __name__ == "__main__":
    key = jax.random.PRNGKey(0)

    batch = 8
    input_dim = 32
    hidden_dims = [64, 32]
    output_heads = {
        "action": {"dim": 3},
        "confidence": {"dim": 1, "activation": "sigmoid"},
        "value": {"dim": 1, "activation": "tanh"},
    }

    key, kx, kp = jax.random.split(key, 3)
    x = jax.random.normal(kx, (batch, input_dim), jnp.float32)
    params = init_policy_head_params(kp, input_dim, hidden_dims, output_heads)

    outs = policy_head_forward(params, x)
    for v in outs.values():
        jax.block_until_ready(v)

    # Shape sanity (matches PyTorch module outputs).
    assert outs["action"].shape == (batch, 3)
    assert outs["confidence"].shape == (batch, 1)
    assert outs["value"].shape == (batch, 1)

    # Numerical sanity vs. f32 reference (loose tolerance: bf16 MXU operands +
    # bf16 output slab).
    ref = policy_head_reference(params, x)
    for name in outs:
        assert jnp.all(jnp.isfinite(outs[name]))
        assert jnp.allclose(outs[name], ref[name], atol=0.1, rtol=0.1), name

    print("KERNEL_OK")
</pallas_src>

<mosaic_0001>
module attributes {stable_mosaic.version = 11 : i64} {
  func.func @kernel(%arg0: i32, %arg1: memref<16x32xbf16, #tpu.memory_space<vmem>>, %arg2: memref<32x64xbf16, #tpu.memory_space<vmem>>, %arg3: memref<64x32xbf16, #tpu.memory_space<vmem>>, %arg4: memref<32x128xbf16, #tpu.memory_space<vmem>>, %arg5: memref<7x128xf32, #tpu.memory_space<vmem>>, %arg6: memref<16x128xbf16, #tpu.memory_space<vmem>>) attributes {dimension_semantics = [#tpu.dimension_semantics<parallel>], iteration_bounds = array<i64: 1>, scalar_prefetch = 0 : i64, scratch_operands = 0 : i64, tpu.core_type = #tpu.core_type<tc>, window_params = [{transform_indices = @transform_0, window_bounds = array<i64: 16, 32>}, {pipeline_mode = #tpu.pipeline_mode<synchronous>, transform_indices = @transform_1, window_bounds = array<i64: 32, 64>}, {pipeline_mode = #tpu.pipeline_mode<synchronous>, transform_indices = @transform_2, window_bounds = array<i64: 64, 32>}, {pipeline_mode = #tpu.pipeline_mode<synchronous>, transform_indices = @transform_3, window_bounds = array<i64: 32, 128>}, {pipeline_mode = #tpu.pipeline_mode<synchronous>, transform_indices = @transform_4, window_bounds = array<i64: 7, 128>}, {transform_indices = @transform_5, window_bounds = array<i64: 16, 128>}]} {
    %c0 = arith.constant 0 : index
    %c0_0 = arith.constant 0 : index
    %0 = vector.load %arg1[%c0, %c0_0] : memref<16x32xbf16, #tpu.memory_space<vmem>>, vector<16x32xbf16>
    %c0_1 = arith.constant 0 : index
    %c0_2 = arith.constant 0 : index
    %1 = vector.load %arg2[%c0_1, %c0_2] : memref<32x64xbf16, #tpu.memory_space<vmem>>, vector<32x64xbf16>
    %cst = arith.constant dense<0.000000e+00> : vector<16x64xf32>
    %2 = tpu.matmul %0, %1, %cst {dimension_numbers = #tpu.dot_dimension_numbers<[1], [0], [0], [1], [0, 0, 1, 1], [], []>} : vector<16x32xbf16>, vector<32x64xbf16>, vector<16x64xf32> -> vector<16x64xf32>
    %c0_3 = arith.constant 0 : index
    %c0_4 = arith.constant 0 : index
    %3 = vector.load %arg5[%c0_3, %c0_4] : memref<7x128xf32, #tpu.memory_space<vmem>>, vector<1x64xf32>
    %c1 = arith.constant 1 : index
    %c0_5 = arith.constant 0 : index
    %4 = vector.load %arg5[%c1, %c0_5] : memref<7x128xf32, #tpu.memory_space<vmem>>, vector<1x64xf32>
    %c2 = arith.constant 2 : index
    %c0_6 = arith.constant 0 : index
    %5 = vector.load %arg5[%c2, %c0_6] : memref<7x128xf32, #tpu.memory_space<vmem>>, vector<1x64xf32>
    %6 = vector.broadcast %3 : vector<1x64xf32> to vector<16x64xf32>
    %7 = arith.addf %2, %6 : vector<16x64xf32>
    %cst_7 = arith.constant dense<0.000000e+00> : vector<16xf32>
    %8 = vector.multi_reduction <add>, %7, %cst_7 [1] : vector<16x64xf32> to vector<16xf32>
    %9 = vector.shape_cast %8 : vector<16xf32> to vector<16x1xf32>
    %cst_8 = arith.constant 6.400000e+01 : f32
    %10 = vector.broadcast %cst_8 : f32 to vector<16x1xf32>
    %11 = arith.divf %9, %10 : vector<16x1xf32>
    %12 = vector.broadcast %11 : vector<16x1xf32> to vector<16x64xf32>
    %13 = arith.subf %7, %12 : vector<16x64xf32>
    %14 = arith.mulf %13, %13 : vector<16x64xf32>
    %cst_9 = arith.constant dense<0.000000e+00> : vector<16xf32>
    %15 = vector.multi_reduction <add>, %14, %cst_9 [1] : vector<16x64xf32> to vector<16xf32>
    %16 = vector.shape_cast %15 : vector<16xf32> to vector<16x1xf32>
    %cst_10 = arith.constant 6.400000e+01 : f32
    %17 = vector.broadcast %cst_10 : f32 to vector<16x1xf32>
    %18 = arith.divf %16, %17 : vector<16x1xf32>
    %cst_11 = arith.constant 9.99999974E-6 : f32
    %19 = vector.broadcast %cst_11 : f32 to vector<16x1xf32>
    %20 = arith.addf %18, %19 : vector<16x1xf32>
    %21 = math.rsqrt %20 : vector<16x1xf32>
    %22 = vector.broadcast %21 : vector<16x1xf32> to vector<16x64xf32>
    %23 = arith.mulf %13, %22 : vector<16x64xf32>
    %24 = vector.broadcast %4 : vector<1x64xf32> to vector<16x64xf32>
    %25 = arith.mulf %23, %24 : vector<16x64xf32>
    %26 = vector.broadcast %5 : vector<1x64xf32> to vector<16x64xf32>
    %27 = arith.addf %25, %26 : vector<16x64xf32>
    %cst_12 = arith.constant 0.000000e+00 : f32
    %28 = vector.broadcast %cst_12 : f32 to vector<16x64xf32>
    %29 = arith.maximumf %27, %28 : vector<16x64xf32>
    %30 = arith.truncf %29 : vector<16x64xf32> to vector<16x64xbf16>
    %c0_13 = arith.constant 0 : index
    %c0_14 = arith.constant 0 : index
    %31 = vector.load %arg3[%c0_13, %c0_14] : memref<64x32xbf16, #tpu.memory_space<vmem>>, vector<64x32xbf16>
    %cst_15 = arith.constant dense<0.000000e+00> : vector<16x32xf32>
    %32 = tpu.matmul %30, %31, %cst_15 {dimension_numbers = #tpu.dot_dimension_numbers<[1], [0], [0], [1], [0, 0, 1, 1], [], []>} : vector<16x64xbf16>, vector<64x32xbf16>, vector<16x32xf32> -> vector<16x32xf32>
    %c3 = arith.constant 3 : index
    %c0_16 = arith.constant 0 : index
    %33 = vector.load %arg5[%c3, %c0_16] : memref<7x128xf32, #tpu.memory_space<vmem>>, vector<1x32xf32>
    %c4 = arith.constant 4 : index
    %c0_17 = arith.constant 0 : index
    %34 = vector.load %arg5[%c4, %c0_17] : memref<7x128xf32, #tpu.memory_space<vmem>>, vector<1x32xf32>
    %c5 = arith.constant 5 : index
    %c0_18 = arith.constant 0 : index
    %35 = vector.load %arg5[%c5, %c0_18] : memref<7x128xf32, #tpu.memory_space<vmem>>, vector<1x32xf32>
    %36 = vector.broadcast %33 : vector<1x32xf32> to vector<16x32xf32>
    %37 = arith.addf %32, %36 : vector<16x32xf32>
    %cst_19 = arith.constant dense<0.000000e+00> : vector<16xf32>
    %38 = vector.multi_reduction <add>, %37, %cst_19 [1] : vector<16x32xf32> to vector<16xf32>
    %39 = vector.shape_cast %38 : vector<16xf32> to vector<16x1xf32>
    %cst_20 = arith.constant 3.200000e+01 : f32
    %40 = vector.broadcast %cst_20 : f32 to vector<16x1xf32>
    %41 = arith.divf %39, %40 : vector<16x1xf32>
    %42 = vector.broadcast %41 : vector<16x1xf32> to vector<16x32xf32>
    %43 = arith.subf %37, %42 : vector<16x32xf32>
    %44 = arith.mulf %43, %43 : vector<16x32xf32>
    %cst_21 = arith.constant dense<0.000000e+00> : vector<16xf32>
    %45 = vector.multi_reduction <add>, %44, %cst_21 [1] : vector<16x32xf32> to vector<16xf32>
    %46 = vector.shape_cast %45 : vector<16xf32> to vector<16x1xf32>
    %cst_22 = arith.constant 3.200000e+01 : f32
    %47 = vector.broadcast %cst_22 : f32 to vector<16x1xf32>
    %48 = arith.divf %46, %47 : vector<16x1xf32>
    %cst_23 = arith.constant 9.99999974E-6 : f32
    %49 = vector.broadcast %cst_23 : f32 to vector<16x1xf32>
    %50 = arith.addf %48, %49 : vector<16x1xf32>
    %51 = math.rsqrt %50 : vector<16x1xf32>
    %52 = vector.broadcast %51 : vector<16x1xf32> to vector<16x32xf32>
    %53 = arith.mulf %43, %52 : vector<16x32xf32>
    %54 = vector.broadcast %34 : vector<1x32xf32> to vector<16x32xf32>
    %55 = arith.mulf %53, %54 : vector<16x32xf32>
    %56 = vector.broadcast %35 : vector<1x32xf32> to vector<16x32xf32>
    %57 = arith.addf %55, %56 : vector<16x32xf32>
    %cst_24 = arith.constant 0.000000e+00 : f32
    %58 = vector.broadcast %cst_24 : f32 to vector<16x32xf32>
    %59 = arith.maximumf %57, %58 : vector<16x32xf32>
    %60 = arith.truncf %59 : vector<16x32xf32> to vector<16x32xbf16>
    %c6 = arith.constant 6 : index
    %c0_25 = arith.constant 0 : index
    %61 = vector.load %arg5[%c6, %c0_25] : memref<7x128xf32, #tpu.memory_space<vmem>>, vector<1x128xf32>
    %c0_26 = arith.constant 0 : index
    %c0_27 = arith.constant 0 : index
    %62 = vector.load %arg4[%c0_26, %c0_27] : memref<32x128xbf16, #tpu.memory_space<vmem>>, vector<32x128xbf16>
    %cst_28 = arith.constant dense<0.000000e+00> : vector<16x128xf32>
    %63 = tpu.matmul %60, %62, %cst_28 {dimension_numbers = #tpu.dot_dimension_numbers<[1], [0], [0], [1], [0, 0, 1, 1], [], []>} : vector<16x32xbf16>, vector<32x128xbf16>, vector<16x128xf32> -> vector<16x128xf32>
    %64 = vector.broadcast %61 : vector<1x128xf32> to vector<16x128xf32>
    %65 = arith.addf %63, %64 : vector<16x128xf32>
    %66 = tpu.iota {dimensions = array<i32: 1>} : vector<16x128xi32>
    %c3_i32 = arith.constant 3 : i32
    %67 = vector.broadcast %c3_i32 : i32 to vector<16x128xi32>
    %68 = arith.cmpi sge, %66, %67 : vector<16x128xi32>
    %c4_i32 = arith.constant 4 : i32
    %69 = vector.broadcast %c4_i32 : i32 to vector<16x128xi32>
    %70 = arith.cmpi slt, %66, %69 : vector<16x128xi32>
    %71 = arith.andi %68, %70 : vector<16x128xi1>
    %72 = arith.negf %65 : vector<16x128xf32>
    %73 = math.exp %72 : vector<16x128xf32>
    %cst_29 = arith.constant 1.000000e+00 : f32
    %74 = vector.broadcast %cst_29 : f32 to vector<16x128xf32>
    %75 = arith.addf %74, %73 : vector<16x128xf32>
    %76 = arith.divf %74, %75 : vector<16x128xf32>
    %77 = arith.select %71, %76, %65 : vector<16x128xi1>, vector<16x128xf32>
    %c4_i32_30 = arith.constant 4 : i32
    %78 = vector.broadcast %c4_i32_30 : i32 to vector<16x128xi32>
    %79 = arith.cmpi sge, %66, %78 : vector<16x128xi32>
    %c5_i32 = arith.constant 5 : i32
    %80 = vector.broadcast %c5_i32 : i32 to vector<16x128xi32>
    %81 = arith.cmpi slt, %66, %80 : vector<16x128xi32>
    %82 = arith.andi %79, %81 : vector<16x128xi1>
    %83 = math.tanh %65 : vector<16x128xf32>
    %84 = arith.select %82, %83, %77 : vector<16x128xi1>, vector<16x128xf32>
    %85 = arith.truncf %84 : vector<16x128xf32> to vector<16x128xbf16>
    %c0_31 = arith.constant 0 : index
    %c0_32 = arith.constant 0 : index
    %86 = vector.load %arg6[%c0_31, %c0_32] : memref<16x128xbf16, #tpu.memory_space<vmem>>, vector<16x128xbf16>
    tpu.vector_store %arg6[%c0_31, %c0_32], %85 {strides = array<i32>} : memref<16x128xbf16, #tpu.memory_space<vmem>>, vector<16x128xbf16>,
    return
  }
  func.func @transform_0(%arg0: i32) -> (i32, i32) {
    %c0_i32 = arith.constant 0 : i32
    %c0_i32_0 = arith.constant 0 : i32
    return %arg0, %c0_i32 : i32, i32
  }
  func.func @transform_1(%arg0: i32) -> (i32, i32) {
    %c0_i32 = arith.constant 0 : i32
    %c0_i32_0 = arith.constant 0 : i32
    %c0_i32_1 = arith.constant 0 : i32
    return %c0_i32, %c0_i32_0 : i32, i32
  }
  func.func @transform_2(%arg0: i32) -> (i32, i32) {
    %c0_i32 = arith.constant 0 : i32
    %c0_i32_0 = arith.constant 0 : i32
    %c0_i32_1 = arith.constant 0 : i32
    return %c0_i32, %c0_i32_0 : i32, i32
  }
  func.func @transform_3(%arg0: i32) -> (i32, i32) {
    %c0_i32 = arith.constant 0 : i32
    %c0_i32_0 = arith.constant 0 : i32
    %c0_i32_1 = arith.constant 0 : i32
    return %c0_i32, %c0_i32_0 : i32, i32
  }
  func.func @transform_4(%arg0: i32) -> (i32, i32) {
    %c0_i32 = arith.constant 0 : i32
    %c0_i32_0 = arith.constant 0 : i32
    %c0_i32_1 = arith.constant 0 : i32
    return %c0_i32, %c0_i32_0 : i32, i32
  }
  func.func @transform_5(%arg0: i32) -> (i32, i32) {
    %c0_i32 = arith.constant 0 : i32
    %c0_i32_0 = arith.constant 0 : i32
    return %arg0, %c0_i32 : i32, i32
  }
}

</mosaic_0001>

<llo_original>
// kernel: tpu_custom_call.1
$region0: #{tpu_custom_call.1}
  #allocation0 [shape = 'u32[]', space=smem, size = 0x4, offset = 0x4, fixed_abs, tag = 'smem constant byte address 0x4 - core index']
  #allocation1 [shape = 'u32[144,128]{1,0:T(1,128)}', space=vmem, size = 0x12000, scoped, tag = 'internal scratch']
  %s0 = inlined_call_operand.vmem [shape: bf16[16,32], index: 0, kind: input, shape index: {}]
  %s1 = inlined_call_operand.vmem [shape: bf16[32,64], index: 1, kind: input, shape index: {}]
  %s2 = inlined_call_operand.vmem [shape: bf16[64,32], index: 2, kind: input, shape index: {}]
  %s3 = inlined_call_operand.vmem [shape: bf16[32,128], index: 3, kind: input, shape index: {}]
  %s4 = inlined_call_operand.vmem [shape: f32[7,128], index: 4, kind: input, shape index: {}]
  %s5 = inlined_call_operand.hbm [shape: bf16[16,128], index: 5, kind: output, shape index: {}]
  %s6 = sld [smem:[#allocation0]]
  $region30: #{tpu_custom_call.1} parent=0
    _
  %s8 = ssub.s32 1, %s6
  %s9 = scalar_select 0, %s8, %s6
  $region1: #{tpu_custom_call.1} parent=0
    #allocation2 [shape = 'u8[4096]{0}', space=vmem, size = 0x1000, scoped, tag = 'output window, operand 0, single buffered']
    #allocation3 [shape = 's32[1]{0}', space=sflag, size = 0x4, scoped, tag = 'scoped memory for tpu_custom_call.1']
    %10 = vsyncpa [#allocation3], 0
    // Predicated region
    $region2: #{tpu_custom_call.1} parent=1 // pred_check
      _
    $region3: #{tpu_custom_call.1} parent=1 // pred_check_branch
      %12 = sbr.rel (0) target = $region5
    $region4: #{tpu_custom_call.1} parent=1 // pred_region
      _
    $region5: #{tpu_custom_call.1} parent=1 // pred_fallthru
      _
    // Predicated region
    $region6: #{tpu_custom_call.1} parent=1 // pred_check
      _
    $region7: #{tpu_custom_call.1} parent=1 // pred_check_branch
      %14 = sbr.rel (0) target = $region9
    $region8: #{tpu_custom_call.1} parent=1 // pred_region
      _
    $region9: #{tpu_custom_call.1} parent=1 // pred_fallthru
      _
    // Predicated region
    $region10: #{tpu_custom_call.1} parent=1 // pred_check
      _
    $region11: #{tpu_custom_call.1} parent=1 // pred_check_branch
      %16 = sbr.rel (0) target = $region13
    $region12: #{tpu_custom_call.1} parent=1 // pred_region
      _
    $region13: #{tpu_custom_call.1} parent=1 // pred_fallthru
      _
    // Predicated region
    $region14: #{tpu_custom_call.1} parent=1 // pred_check
      _
    $region15: #{tpu_custom_call.1} parent=1 // pred_check_branch
      %18 = sbr.rel (0) target = $region17
    $region16: #{tpu_custom_call.1} parent=1 // pred_region
      _
    $region17: #{tpu_custom_call.1} parent=1 // pred_fallthru
      _
    // Predicated region
    $region18: #{tpu_custom_call.1} parent=1 // pred_check
      _
    $region19: #{tpu_custom_call.1} parent=1 // pred_check_branch
      %20 = sbr.rel (0) target = $region21
    $region20: #{tpu_custom_call.1} parent=1 // pred_region
      _
    $region21: #{tpu_custom_call.1} parent=1 // pred_fallthru
      _
    %v22 = vld [vmem:[%s0] sm:$0xf]
    %v23 = vld [vmem:[%s0 + $0x4] sm:$0xf]
    %v24 = vld [vmem:[%s1] sm:$0xf]
    %v25 = vld [vmem:[%s1 + $0x4] sm:$0xf]
    %v26 = vld [vmem:[%s1 + $0x8] sm:$0xf]
    %v27 = vld [vmem:[%s1 + $0xc] sm:$0xf]
    %v28 = vld [vmem:[%s4] sm:$0x1]
    %v29 = vld [vmem:[%s4 + $0x1] sm:$0x1]
    %v30 = vld [vmem:[%s4 + $0x2] sm:$0x1]
    %v31 = vlaneseq
    %v32 = vshrl.u32 %v31, 7
    %v33 = vsub.s32 0, %v32
    %v34 = vrot.slane %v28, %v33
    %v37 = vunpack.c.l.b16 %v22
    %v38 = vunpack.c.l.b16 %v23
    %v39 = vpack.c.b16 %v38, %v37
    %v44 = vunpack.c.l.b16 %v24
    %v45 = vunpack.c.l.b16 %v25
    %v46 = vunpack.c.l.b16 %v26
    %v47 = vunpack.c.l.b16 %v27
    %v48 = vpack.c.b16 %v45, %v44
    %v49 = vpack.c.b16 %v47, %v46
    %vm52 = vcmask 261120
    %v54 = vsel %vm52, %v39, 0
    %56 = vmatprep.subr.bf16.mxu0 0
    %57 = vmatpush1.bf16.msra.mxu0 0
    %58 = vmatprep.subr.bf16.mxu0 0
    %59 = vmatpush1.bf16.msra.mxu0 0
    %60 = vmatprep.subr.bf16.mxu0 0
    %61 = vmatpush1.bf16.msra.mxu0 0
    %62 = vmatprep.subr.bf16.mxu0 0
    %63 = vmatpush1.bf16.msra.mxu0 0
    %64 = vmatprep.subr.bf16.mxu0 0
    %65 = vmatpush1.bf16.msra.mxu0 0
    %66 = vmatprep.subr.bf16.mxu0 0
    %67 = vmatpush1.bf16.msra.mxu0 0
    %68 = vmatprep.subr.bf16.mxu0 0
    %69 = vmatpush1.bf16.msra.mxu0 %v49
    %70 = vmatprep.subr.bf16.mxu0 0
    %71 = vmatpush1.bf16.msra.mxu0 %v48
    %72 = vmatprep.subr.bf16.mxu0 0
    %73 = vmatpush2.bf16.msra.mxu0 0
    %74 = vmatprep.subr.bf16.mxu0 0
    %75 = vmatpush2.bf16.msra.mxu0 0
    %76 = vmatprep.subr.bf16.mxu0 0
    %77 = vmatpush2.bf16.msra.mxu0 0
    %78 = vmatprep.subr.bf16.mxu0 0
    %79 = vmatpush2.bf16.msra.mxu0 0
    %80 = vmatprep.subr.bf16.mxu0 0
    %81 = vmatpush2.bf16.msra.mxu0 0
    %82 = vmatprep.subr.bf16.mxu0 0
    %83 = vmatpush2.bf16.msra.mxu0 0
    %84 = vmatprep.subr.bf16.mxu0 0
    %85 = vmatpush2.bf16.msra.mxu0 0
    %86 = vmatprep.subr.bf16.mxu0 0
    %87 = vmatpush2.bf16.msra.mxu0 0
    %88 = vmatprep.mubr.bf16.mxu0 0
    %89 = vmatmul.mubr.bf16.gmra.mxu0 %v54
    %v90 = vpop.f32.mrf.mxu0
    %v91 = vadd.f32 %v34, %v90
    %v92 = vpop.f32.mrf.mxu0
    %v93 = vpop.f32.mrf.mxu0
    %v94 = vadd.f32 %v34, %v93
    %v95 = vpop.f32.mrf.mxu0
    %96 = vdwg.mxu0
    %vm97 = vcmask 523264
    %v98 = vsel %vm97, %v91, 0.0
    %99 = vadd.xlane.f32.xlu0 %v98
    %v100 = vpop.xlane.xlu0 %99
    %v101 = vsel %vm97, %v94, 0.0
    %102 = vadd.xlane.f32.xlu0 %v101
    %v103 = vpop.xlane.xlu0 %102
    %v104 = vrcp.pop 64.0
    %v105 = vmul.f32 %v100, %v104
    %v106 = vmul.f32 %v103, %v104
    %v107 = vsub.f32 %v91, %v105
    %v108 = vsub.f32 %v94, %v106
    %v109 = vmul.f32 %v107, %v107
    %v110 = vmul.f32 %v108, %v108
    %v111 = vsel %vm97, %v109, 0.0
    %112 = vadd.xlane.f32.xlu0 %v111
    %v113 = vpop.xlane.xlu0 %112
    %v114 = vsel %vm97, %v110, 0.0
    %115 = vadd.xlane.f32.xlu0 %v114
    %v116 = vpop.xlane.xlu0 %115
    %v117 = vmul.f32 %v113, %v104
    %v118 = vmul.f32 %v116, %v104
    %v119 = vadd.f32 %v117, 1e-05
    %v120 = vadd.f32 %v118, 1e-05
    %v121 = vrsqrt.pop %v119
    %v122 = vrsqrt.pop %v120
    %v123 = vmul.f32 %v107, %v121
    %v124 = vmul.f32 %v108, %v122
    %v125 = vlaneseq
    %v126 = vshrl.u32 %v125, 7
    %v127 = vsub.s32 0, %v126
    %v128 = vrot.slane %v29, %v127
    %v129 = vmul.f32 %v123, %v128
    %v130 = vmul.f32 %v124, %v128
    %v131 = vlaneseq
    %v132 = vshrl.u32 %v131, 7
    %v133 = vsub.s32 0, %v132
    %v134 = vrot.slane %v30, %v133
    %v135 = vadd.f32 %v129, %v134
    %v136 = vadd.f32 %v130, %v134
    %v137 = vmax.f32 %v135, 0.0
    %v138 = vmax.f32 %v136, 0.0
    %v139 = vpack.c.bf16 %v138, %v137
    %v140 = vld [vmem:[%s2] sm:$0xf]
    %v141 = vld [vmem:[%s2 + $0x4] sm:$0xf]
    %v142 = vld [vmem:[%s2 + $0x8] sm:$0xf]
    %v143 = vld [vmem:[%s2 + $0xc] sm:$0xf]
    %v144 = vld [vmem:[%s2 + $0x10] sm:$0xf]
    %v145 = vld [vmem:[%s2 + $0x14] sm:$0xf]
    %v146 = vld [vmem:[%s2 + $0x18] sm:$0xf]
    %v147 = vld [vmem:[%s2 + $0x1c] sm:$0xf]
    %v148 = vld [vmem:[%s4 + $0x3] sm:$0x1]
    %v149 = vld [vmem:[%s4 + $0x4] sm:$0x1]
    %v150 = vld [vmem:[%s4 + $0x5] sm:$0x1]
    %v151 = vlaneseq
    %v152 = vshrl.u32 %v151, 7
    %v153 = vsub.s32 0, %v152
    %v154 = vrot.slane %v148, %v153
    %v163 = vunpack.c.l.b16 %v140
    %v164 = vunpack.c.l.b16 %v141
    %v165 = vunpack.c.l.b16 %v142
    %v166 = vunpack.c.l.b16 %v143
    %v167 = vunpack.c.l.b16 %v144
    %v168 = vunpack.c.l.b16 %v145
    %v169 = vunpack.c.l.b16 %v146
    %v170 = vunpack.c.l.b16 %v147
    %v171 = vpack.c.b16 %v164, %v163
    %v172 = vpack.c.b16 %v166, %v165
    %v173 = vpack.c.b16 %v168, %v167
    %v174 = vpack.c.b16 %v170, %v169
    %v180 = vsel %vm97, %v139, 0
    %182 = vmatprep.subr.bf16.mxu0 0
    %183 = vmatpush1.bf16.msra.mxu0 0
    %184 = vmatprep.subr.bf16.mxu0 0
    %185 = vmatpush1.bf16.msra.mxu0 0
    %186 = vmatprep.subr.bf16.mxu0 0
    %187 = vmatpush1.bf16.msra.mxu0 0
    %188 = vmatprep.subr.bf16.mxu0 0
    %189 = vmatpush1.bf16.msra.mxu0 0
    %190 = vmatprep.subr.bf16.mxu0 0
    %191 = vmatpush1.bf16.msra.mxu0 %v174
    %192 = vmatprep.subr.bf16.mxu0 0
    %193 = vmatpush1.bf16.msra.mxu0 %v173
    %194 = vmatprep.subr.bf16.mxu0 0
    %195 = vmatpush1.bf16.msra.mxu0 %v172
    %196 = vmatprep.subr.bf16.mxu0 0
    %197 = vmatpush1.bf16.msra.mxu0 %v171
    %198 = vmatprep.subr.bf16.mxu0 0
    %199 = vmatpush2.bf16.msra.mxu0 0
    %200 = vmatprep.subr.bf16.mxu0 0
    %201 = vmatpush2.bf16.msra.mxu0 0
    %202 = vmatprep.subr.bf16.mxu0 0
    %203 = vmatpush2.bf16.msra.mxu0 0
    %204 = vmatprep.subr.bf16.mxu0 0
    %205 = vmatpush2.bf16.msra.mxu0 0
    %206 = vmatprep.subr.bf16.mxu0 0
    %207 = vmatpush2.bf16.msra.mxu0 0
    %208 = vmatprep.subr.bf16.mxu0 0
    %209 = vmatpush2.bf16.msra.mxu0 0
    %210 = vmatprep.subr.bf16.mxu0 0
    %211 = vmatpush2.bf16.msra.mxu0 0
    %212 = vmatprep.subr.bf16.mxu0 0
    %213 = vmatpush2.bf16.msra.mxu0 0
    %214 = vmatprep.mubr.bf16.mxu0 0
    %215 = vmatmul.mubr.bf16.gmra.mxu0 %v180
    %v216 = vpop.f32.mrf.mxu0
    %v217 = vadd.f32 %v154, %v216
    %v218 = vpop.f32.mrf.mxu0
    %v219 = vpop.f32.mrf.mxu0
    %v220 = vadd.f32 %v154, %v219
    %v221 = vpop.f32.mrf.mxu0
    %222 = vdwg.mxu0
    %v223 = vsel %vm52, %v217, 0.0
    %224 = vadd.xlane.f32.xlu0 %v223
    %v225 = vpop.xlane.xlu0 %224
    %v226 = vsel %vm52, %v220, 0.0
    %227 = vadd.xlane.f32.xlu0 %v226
    %v228 = vpop.xlane.xlu0 %227
    %v229 = vrcp.pop 32.0
    %v230 = vmul.f32 %v225, %v229
    %v231 = vmul.f32 %v228, %v229
    %v232 = vsub.f32 %v217, %v230
    %v233 = vsub.f32 %v220, %v231
    %v234 = vmul.f32 %v232, %v232
    %v235 = vmul.f32 %v233, %v233
    %v236 = vsel %vm52, %v234, 0.0
    %237 = vadd.xlane.f32.xlu0 %v236
    %v238 = vpop.xlane.xlu0 %237
    %v239 = vsel %vm52, %v235, 0.0
    %240 = vadd.xlane.f32.xlu0 %v239
    %v241 = vpop.xlane.xlu0 %240
    %v242 = vmul.f32 %v238, %v229
    %v243 = vmul.f32 %v241, %v229
    %v244 = vadd.f32 %v242, 1e-05
    %v245 = vadd.f32 %v243, 1e-05
    %v246 = vrsqrt.pop %v244
    %v247 = vrsqrt.pop %v245
    %v248 = vmul.f32 %v232, %v246
    %v249 = vmul.f32 %v233, %v247
    %v250 = vlaneseq
    %v251 = vshrl.u32 %v250, 7
    %v252 = vsub.s32 0, %v251
    %v253 = vrot.slane %v149, %v252
    %v254 = vmul.f32 %v248, %v253
    %v255 = vmul.f32 %v249, %v253
    %v256 = vlaneseq
    %v257 = vshrl.u32 %v256, 7
    %v258 = vsub.s32 0, %v257
    %v259 = vrot.slane %v150, %v258
    %v260 = vadd.f32 %v254, %v259
    %v261 = vadd.f32 %v255, %v259
    %v262 = vmax.f32 %v260, 0.0
    %v263 = vmax.f32 %v261, 0.0
    %v264 = vpack.c.bf16 %v263, %v262
    %v265 = vld [vmem:[%s4 + $0x6] sm:$0x1]
    %v266 = vld [vmem:[%s3] sm:$0xf]
    %v267 = vld [vmem:[%s3 + $0x4] sm:$0xf]
    %v268 = vld [vmem:[%s3 + $0x8] sm:$0xf]
    %v269 = vld [vmem:[%s3 + $0xc] sm:$0xf]
    %v270 = vlaneseq
    %v271 = vshrl.u32 %v270, 7
    %v272 = vsub.s32 0, %v271
    %v273 = vrot.slane %v265, %v272
    %v278 = vunpack.c.l.b16 %v266
    %v279 = vunpack.c.l.b16 %v267
    %v280 = vunpack.c.l.b16 %v268
    %v281 = vunpack.c.l.b16 %v269
    %v282 = vpack.c.b16 %v279, %v278
    %v283 = vpack.c.b16 %v281, %v280
    %v287 = vsel %vm52, %v264, 0
    %289 = vmatprep.subr.bf16.mxu0 0
    %290 = vmatpush1.bf16.msra.mxu0 0
    %291 = vmatprep.subr.bf16.mxu0 0
    %292 = vmatpush1.bf16.msra.mxu0 0
    %293 = vmatprep.subr.bf16.mxu0 0
    %294 = vmatpush1.bf16.msra.mxu0 0
    %295 = vmatprep.subr.bf16.mxu0 0
    %296 = vmatpush1.bf16.msra.mxu0 0
    %297 = vmatprep.subr.bf16.mxu0 0
    %298 = vmatpush1.bf16.msra.mxu0 0
    %299 = vmatprep.subr.bf16.mxu0 0
    %300 = vmatpush1.bf16.msra.mxu0 0
    %301 = vmatprep.subr.bf16.mxu0 0
    %302 = vmatpush1.bf16.msra.mxu0 %v283
    %303 = vmatprep.subr.bf16.mxu0 0
    %304 = vmatpush1.bf16.msra.mxu0 %v282
    %305 = vmatprep.subr.bf16.mxu0 0
    %306 = vmatpush2.bf16.msra.mxu0 0
    %307 = vmatprep.subr.bf16.mxu0 0
    %308 = vmatpush2.bf16.msra.mxu0 0
    %309 = vmatprep.subr.bf16.mxu0 0
    %310 = vmatpush2.bf16.msra.mxu0 0
    %311 = vmatprep.subr.bf16.mxu0 0
    %312 = vmatpush2.bf16.msra.mxu0 0
    %313 = vmatprep.subr.bf16.mxu0 0
    %314 = vmatpush2.bf16.msra.mxu0 0
    %315 = vmatprep.subr.bf16.mxu0 0
    %316 = vmatpush2.bf16.msra.mxu0 0
    %317 = vmatprep.subr.bf16.mxu0 0
    %318 = vmatpush2.bf16.msra.mxu0 0
    %319 = vmatprep.subr.bf16.mxu0 0
    %320 = vmatpush2.bf16.msra.mxu0 0
    %321 = vmatprep.mubr.bf16.mxu0 0
    %322 = vmatmul.mubr.bf16.gmra.mxu0 %v287
    %v323 = vpop.f32.mrf.mxu0
    %v324 = vadd.f32 %v273, %v323
    %v325 = vpop.f32.mrf.mxu0
    %v326 = vpop.f32.mrf.mxu0
    %v327 = vadd.f32 %v273, %v326
    %v328 = vpop.f32.mrf.mxu0
    %329 = vdwg.mxu0
    %v330 = vlaneseq
    %v331 = vand.u32 %v330, 127
    %vm332 = vcmp.ge.s32.totalorder %v331, 3
    %vm333 = vcmp.lt.s32.totalorder %v331, 4
    %vm334 = vmand %vm332, %vm333
    %v335 = vxor.u32 %v324, 2147483648
    %v336 = vxor.u32 %v327, 2147483648
    %v337 = vmul.f32 %v335, 1.442695
    %v338 = vpow.pop %v337
    %v339 = vmul.f32 %v336, 1.442695
    %v340 = vpow.pop %v339
    %v341 = vadd.f32 %v338, 1.0
    %v342 = vadd.f32 %v340, 1.0
    %v343 = vrcp.pop %v341
    %v344 = vmul.f32 1.0, %v343
    %v345 = vrcp.pop %v342
    %v346 = vmul.f32 1.0, %v345
    %v347 = vsel %vm334, %v344, %v324
    %v348 = vsel %vm334, %v346, %v327
    %vm349 = vcmp.ge.s32.totalorder %v331, 4
    %vm350 = vcmp.lt.s32.totalorder %v331, 5
    %vm351 = vmand %vm349, %vm350
    %v352 = vtanh.pop %v324
    %v353 = vtanh.pop %v327
    %v354 = vsel %vm351, %v352, %v347
    %v355 = vsel %vm351, %v353, %v348
    %v356 = vpack.c.bf16 %v355, %v354
    %v358 = vunpack.c.l.b16 %v356
    %v359 = vunpack.c.h.b16 %v356
    %v360 = vpack.c.b16 %v358, %v358
    %v361 = vpack.c.b16 %v359, %v359
    %364 = vst [vmem:[#allocation2] sm:$0xf] %v360
    %365 = vst [vmem:[#allocation2 + $0x4] sm:$0xf] %v361
    // Predicated region
    $region22: #{tpu_custom_call.1} parent=1 // pred_check
      _
    $region23: #{tpu_custom_call.1} parent=1 // pred_check_branch
      %367 = sbr.rel (0) target = $region25
    $region24: #{tpu_custom_call.1} parent=1 // pred_region
      %s369 = ssub.s32 128, 128
      %370 = vsyncadd [#allocation3], %s369
      %s371 = sshll.u32 [#allocation2], 4
      %s372 = int_to_ptr.vmem [resolvable:$true] %s371
      %377 = dma.vmem_to_hbm [thread:$0]  %s372, 128, %s5, [#allocation3], 64, 64, 4
    $region25: #{tpu_custom_call.1} parent=1 // pred_fallthru
      _
    // Predicated region
    $region26: #{tpu_custom_call.1} parent=1 // pred_check
      _
    $region27: #{tpu_custom_call.1} parent=1 // pred_check_branch
      %379 = sbr.rel (0) target = $region29
    $region28: #{tpu_custom_call.1} parent=1 // pred_region
      %380 = dma.done [#allocation3], 128
    $region29: #{tpu_custom_call.1} parent=1 // pred_fallthru
      _
    %381 = vsyncpa [#allocation3], 1

</llo_original>
